<compile_context>
chip_gen: v7x
topology: tpu7x:2x2x1
jax: 0.10.0
libtpu: 0.0.40
codegen_flags: <defaults>
</compile_context>

<pallas_src>
import functools

import jax
import jax.numpy as jnp
from jax import lax
from jax.experimental import pallas as pl
from jax.experimental.pallas import tpu as pltpu

L2_REG = 0.003
N_PER_CLASS = 2          # kernel implements the default num_per_class=2 path
_NEG_BIG = -1e30


def _npair_ce_kernel(a_ref, p_ref, lab_r_ref, lab_c_ref, invcnt_ref, out_ref,
                     m_s, l_s, wz_s, *, n_valid, tc, ce_scale, col_pad):
    """One (row-tile, col-tile) grid step of the streamed N-pair cross entropy."""
    k = pl.program_id(1)              # positive-col tile (reduction, innermost)
    nk = pl.num_programs(1)

    @pl.when(k == 0)
    def _init():
        m_s[...] = jnp.full(m_s.shape, -jnp.inf, jnp.float32)
        l_s[...] = jnp.zeros(l_s.shape, jnp.float32)
        wz_s[...] = jnp.zeros(wz_s.shape, jnp.float32)

    # MXU matmul in the storage dtype (bf16 by default), f32 accumulation.
    # Contract the LAST dim of BOTH operands: no transposed copy of p is made.
    logits = lax.dot_general(a_ref[...], p_ref[...],
                             dimension_numbers=(((1,), (1,)), ((), ())),
                             preferred_element_type=jnp.float32)   # (TR, TC)

    lab_r = lab_r_ref[...]            # (TR, 1) int32 anchor labels
    lab_c = lab_c_ref[...]            # (1, TC) int32 positive labels

    def _step(mask_cols):
        if mask_cols:
            # Only the last column tile can hold padded columns.  Keep col_valid
            # inside eq: padded col labels are -1 and could collide with
            # legitimate user labels.
            col_ids = k * tc + lax.broadcasted_iota(jnp.int32, (1, tc), 1)
            col_valid = col_ids < n_valid
            eq = jnp.logical_and(lab_r == lab_c, col_valid).astype(jnp.float32)
            z = jnp.where(col_valid, logits, _NEG_BIG)
        else:
            eq = (lab_r == lab_c).astype(jnp.float32)
            z = logits
        m_prev = m_s[...]
        m_new = jnp.maximum(m_prev, jnp.max(z, axis=-1, keepdims=True))
        alpha = jnp.exp(m_prev - m_new)
        # exp(-1e30 - m_new) underflows to exactly 0 -> no second select needed.
        e = jnp.exp(z - m_new)
        l_s[...] = alpha * l_s[...] + jnp.sum(e, axis=-1, keepdims=True)
        wz_s[...] = wz_s[...] + jnp.sum(eq * logits, axis=-1, keepdims=True)
        m_s[...] = m_new

    if not col_pad:
        _step(False)                     # N is column-tile aligned: never mask
    else:
        @pl.when(k < nk - 1)
        def _interior():                 # fast path: no masking VPU work
            _step(False)

        @pl.when(k == nk - 1)
        def _edge():                     # only tile with padded columns
            _step(True)

    @pl.when(k == nk - 1)
    def _finalize():
        lse = m_s[...] + jnp.log(l_s[...])
        # Padded rows are finite garbage here; the wrapper slices them off.
        out_ref[...] = (lse - wz_s[...] * invcnt_ref[...]) * ce_scale


def _round_up(a, m):
    return ((a + m - 1) // m) * m


def npair_loss(x, label, *, matmul_dtype=jnp.bfloat16, tr=None, tc=None):
    """x: (2*N, D) float, label: (2*N,) int  ->  scalar float32 N-pair loss."""
    total, d = x.shape
    assert total % N_PER_CLASS == 0
    n = total // N_PER_CLASS

    xf = x.astype(jnp.float32)
    anchor_f = xf[:n]                    # samples[0]
    positive_f = xf[n:2 * n]             # samples[1]
    lab = label[:n].astype(jnp.int32)    # labels[0]

    # L2 terms stay f32 and live in the wrapper: O(N*D) reduce, unaffected by
    # the bf16 matmul cast, and keeps the kernel row tiles perfectly balanced.
    l2 = (jnp.sum(anchor_f * anchor_f) + jnp.sum(positive_f * positive_f)) / n

    # Per-row positive-match count (soft-label normalizer), O(N log N).
    # Passing 1/cnt deletes one full-tile cross-lane reduction per grid step.
    sorted_lab = jnp.sort(lab)
    cnt = (jnp.searchsorted(sorted_lab, lab, side='right')
           - jnp.searchsorted(sorted_lab, lab, side='left')).astype(jnp.float32)
    inv_cnt = 1.0 / cnt

    # ---- tile selection --------------------------------------------------
    itemsize = jnp.dtype(matmul_dtype).itemsize
    if tc is None:
        npc_res = _round_up(n, 128)
        tr_res = min(256, _round_up(n, 8))
        resident_cost = (2 * npc_res * d * itemsize       # positive (dbl buf)
                         + 2 * tr_res * d * itemsize      # anchor   (dbl buf)
                         + 4 * tr_res * npc_res * 4)      # logits intermediates
        if resident_cost <= 20 * 1024 * 1024:
            tc = npc_res                 # whole positive matrix VMEM-resident,
            if tr is None:               # read from HBM exactly once
                tr = tr_res
        else:
            tc = 256
            if tr is None:
                # Large anchor row tile: positive HBM traffic ~ N^2*D*B/TR.
                tr = 512 if d <= 2048 else 256
    if tr is None:
        tr = min(512, _round_up(n, 8))

    n_pad_r = _round_up(n, tr)
    n_pad_c = _round_up(n, tc)
    pad_r = n_pad_r - n
    pad_c = n_pad_c - n

    a_mm = anchor_f.astype(matmul_dtype)
    p_mm = positive_f.astype(matmul_dtype)
    if pad_r:
        a_mm = jnp.pad(a_mm, ((0, pad_r), (0, 0)))
    if pad_c:
        p_mm = jnp.pad(p_mm, ((0, pad_c), (0, 0)))
    lab_rows = jnp.pad(lab, (0, pad_r), constant_values=-1).reshape(n_pad_r, 1)
    lab_cols = jnp.pad(lab, (0, pad_c), constant_values=-1).reshape(1, n_pad_c)
    invcnt_rows = jnp.pad(inv_cnt, (0, pad_r)).reshape(n_pad_r, 1)

    grid = (n_pad_r // tr, n_pad_c // tc)
    streaming = grid[1] > 1

    kernel = functools.partial(
        _npair_ce_kernel, n_valid=n, tc=tc,
        ce_scale=1.0 / (n * (N_PER_CLASS - 1)), col_pad=pad_c > 0)

    # Deeper buffering on the streamed positive tile when D is small (per-step
    # matmul too short to hide the DMA at the default depth of 2).
    if streaming and d <= 512:
        pos_spec = pl.BlockSpec((tc, d), lambda i, k: (k, 0),
                                pipeline_mode=pl.Buffered(3))
    else:
        pos_spec = pl.BlockSpec((tc, d), lambda i, k: (k, 0))

    # VMEM budget: ~48 MiB is safe on v7x's 64 MiB physical; use more headroom
    # on 128 MiB chips (v5e/v6e) when the hardware query is available.
    vmem_limit = 48 * 1024 * 1024
    try:
        cap = pltpu.get_tpu_info().vmem_capacity_bytes
        vmem_limit = min(int(cap) * 3 // 4, 96 * 1024 * 1024)
    except Exception:
        pass

    out = pl.pallas_call(
        kernel,
        out_shape=jax.ShapeDtypeStruct((n_pad_r, 1), jnp.float32),
        grid_spec=pltpu.PrefetchScalarGridSpec(
            num_scalar_prefetch=0,
            grid=grid,
            in_specs=[
                pl.BlockSpec((tr, d), lambda i, k: (i, 0)),   # anchor row tile
                pos_spec,                                     # positive col tile
                pl.BlockSpec((tr, 1), lambda i, k: (i, 0)),   # row labels
                pl.BlockSpec((1, tc), lambda i, k: (0, k)),   # col labels
                pl.BlockSpec((tr, 1), lambda i, k: (i, 0)),   # 1 / match count
            ],
            out_specs=pl.BlockSpec((tr, 1), lambda i, k: (i, 0)),
            scratch_shapes=[
                pltpu.VMEM((tr, 1), jnp.float32),   # running row max
                pltpu.VMEM((tr, 1), jnp.float32),   # running sum exp
                pltpu.VMEM((tr, 1), jnp.float32),   # running sum(eq * logits)
            ]),
        compiler_params=pltpu.CompilerParams(
            dimension_semantics=("parallel", "arbitrary"),
            vmem_limit_bytes=vmem_limit),
    )(a_mm, p_mm, lab_rows, lab_cols, invcnt_rows)

    loss_ce = jnp.sum(out[:n, 0])        # drop padded rows; trivial final reduce
    return loss_ce + L2_REG * l2 * 0.25


def _npair_loss_ref(x, label):
    """Pure-JAX reference mirroring the PyTorch forward (equal_shape=True)."""
    total, _ = x.shape
    n = total // N_PER_CLASS
    xf = x.astype(jnp.float32)
    anchor, positive = xf[:n], xf[n:2 * n]
    lab = label[:n]
    l2 = (jnp.sum(anchor ** 2) + jnp.sum(positive ** 2)) / n
    sim = (lab[:, None] == lab[None, :]).astype(jnp.float32)
    sim = sim / jnp.sum(sim, axis=1, keepdims=True)
    logits = anchor @ positive.T
    logp = jax.nn.log_softmax(logits, axis=-1)
    ce = jnp.mean(jnp.sum(-sim * logp, axis=-1))
    return ce / (N_PER_CLASS - 1) + L2_REG * l2 * 0.25


if __name__ == "__main__":
    key = jax.random.PRNGKey(0)
    k1, k2, k3, k4 = jax.random.split(key, 4)

    # case 1: small single-tile, f32 matmul path (exact-semantics check)
    n1, d1 = 8, 32
    x1 = jax.random.normal(k1, (N_PER_CLASS * n1, d1), dtype=jnp.float32)
    base1 = jax.random.randint(k2, (n1,), 0, 4, dtype=jnp.int32)
    lab1 = jnp.concatenate([base1, base1], axis=0)
    loss1 = jax.block_until_ready(npair_loss(x1, lab1, matmul_dtype=jnp.float32))
    ref1 = jax.block_until_ready(_npair_loss_ref(x1, lab1))
    assert jnp.allclose(loss1, ref1, rtol=1e-4, atol=1e-4), (loss1, ref1)

    # case 2: resident-positive path with column padding, default bf16 matmul
    n2, d2 = 160, 128
    x2 = jax.random.normal(k3, (N_PER_CLASS * n2, d2), dtype=jnp.float32)
    base2 = jax.random.randint(k4, (n2,), 0, 16, dtype=jnp.int32)
    lab2 = jnp.concatenate([base2, base2], axis=0)
    loss2 = jax.block_until_ready(npair_loss(x2, lab2))
    ref2 = jax.block_until_ready(_npair_loss_ref(x2, lab2))
    assert jnp.allclose(loss2, ref2, rtol=2e-2, atol=2e-2), (loss2, ref2)

    # case 3: forced multi-tile streaming path (interior fast path + masked edge
    # tile + row padding + Buffered(3) positive pipeline), bf16 matmul
    loss3 = jax.block_until_ready(npair_loss(x2, lab2, tr=64, tc=128))
    assert jnp.allclose(loss3, ref2, rtol=2e-2, atol=2e-2), (loss3, ref2)

    print("KERNEL_OK")
</pallas_src>

<mosaic_0001>
module attributes {stable_mosaic.version = 11 : i64} {
  func.func @_npair_ce_kernel(%arg0: i32, %arg1: i32, %arg2: memref<8x32xf32, #tpu.memory_space<vmem>>, %arg3: memref<128x32xf32, #tpu.memory_space<vmem>>, %arg4: memref<8x1xi32, #tpu.memory_space<vmem>>, %arg5: memref<1x128xi32, #tpu.memory_space<vmem>>, %arg6: memref<8x1xf32, #tpu.memory_space<vmem>>, %arg7: memref<8x1xf32, #tpu.memory_space<vmem>>, %arg8: memref<8x1xf32, #tpu.memory_space<vmem>>, %arg9: memref<8x1xf32, #tpu.memory_space<vmem>>, %arg10: memref<8x1xf32, #tpu.memory_space<vmem>>) attributes {dimension_semantics = [#tpu.dimension_semantics<parallel>, #tpu.dimension_semantics<arbitrary>], iteration_bounds = array<i64: 1, 1>, scalar_prefetch = 0 : i64, scratch_operands = 3 : i64, tpu.core_type = #tpu.core_type<tc>, window_params = [{transform_indices = @transform_0, window_bounds = array<i64: 8, 32>}, {transform_indices = @transform_1, window_bounds = array<i64: 128, 32>}, {transform_indices = @transform_2, window_bounds = array<i64: 8, 1>}, {transform_indices = @transform_3, window_bounds = array<i64: 1, 128>}, {transform_indices = @transform_4, window_bounds = array<i64: 8, 1>}, {transform_indices = @transform_5, window_bounds = array<i64: 8, 1>}]} {
    %c0_i32 = arith.constant 0 : i32
    %0 = arith.cmpi eq, %arg1, %c0_i32 : i32
    %1 = arith.extui %0 : i1 to i32
    %c0_i32_0 = arith.constant 0 : i32
    %2 = arith.cmpi ne, %1, %c0_i32_0 : i32
    scf.if %2 {
      %cst_14 = arith.constant 0xFF800000 : f32
      %17 = vector.broadcast %cst_14 : f32 to vector<8x1xf32>
      %c0_15 = arith.constant 0 : index
      %c0_16 = arith.constant 0 : index
      %18 = vector.load %arg8[%c0_15, %c0_16] : memref<8x1xf32, #tpu.memory_space<vmem>>, vector<8x1xf32>
      tpu.vector_store %arg8[%c0_15, %c0_16], %17 {strides = array<i32>} : memref<8x1xf32, #tpu.memory_space<vmem>>, vector<8x1xf32>,
      %cst_17 = arith.constant 0.000000e+00 : f32
      %19 = vector.broadcast %cst_17 : f32 to vector<8x1xf32>
      %c0_18 = arith.constant 0 : index
      %c0_19 = arith.constant 0 : index
      %20 = vector.load %arg9[%c0_18, %c0_19] : memref<8x1xf32, #tpu.memory_space<vmem>>, vector<8x1xf32>
      tpu.vector_store %arg9[%c0_18, %c0_19], %19 {strides = array<i32>} : memref<8x1xf32, #tpu.memory_space<vmem>>, vector<8x1xf32>,
      %cst_20 = arith.constant 0.000000e+00 : f32
      %21 = vector.broadcast %cst_20 : f32 to vector<8x1xf32>
      %c0_21 = arith.constant 0 : index
      %c0_22 = arith.constant 0 : index
      %22 = vector.load %arg10[%c0_21, %c0_22] : memref<8x1xf32, #tpu.memory_space<vmem>>, vector<8x1xf32>
      tpu.vector_store %arg10[%c0_21, %c0_22], %21 {strides = array<i32>} : memref<8x1xf32, #tpu.memory_space<vmem>>, vector<8x1xf32>,
    } else {
    }
    %c0 = arith.constant 0 : index
    %c0_1 = arith.constant 0 : index
    %3 = vector.load %arg2[%c0, %c0_1] : memref<8x32xf32, #tpu.memory_space<vmem>>, vector<8x32xf32>
    %c0_2 = arith.constant 0 : index
    %c0_3 = arith.constant 0 : index
    %4 = vector.load %arg3[%c0_2, %c0_3] : memref<128x32xf32, #tpu.memory_space<vmem>>, vector<128x32xf32>
    %cst = arith.constant dense<0.000000e+00> : vector<8x128xf32>
    %5 = tpu.matmul %3, %4, %cst {dimension_numbers = #tpu.dot_dimension_numbers<[1], [1], [0], [0], [0, 0, 1, 0], [], []>} : vector<8x32xf32>, vector<128x32xf32>, vector<8x128xf32> -> vector<8x128xf32>
    %c0_4 = arith.constant 0 : index
    %c0_5 = arith.constant 0 : index
    %6 = vector.load %arg4[%c0_4, %c0_5] : memref<8x1xi32, #tpu.memory_space<vmem>>, vector<8x1xi32>
    %c0_6 = arith.constant 0 : index
    %c0_7 = arith.constant 0 : index
    %7 = vector.load %arg5[%c0_6, %c0_7] : memref<1x128xi32, #tpu.memory_space<vmem>>, vector<1x128xi32>
    %c0_i32_8 = arith.constant 0 : i32
    %8 = arith.cmpi slt, %arg1, %c0_i32_8 : i32
    %9 = arith.extui %8 : i1 to i32
    %c0_i32_9 = arith.constant 0 : i32
    %10 = arith.cmpi ne, %9, %c0_i32_9 : i32
    scf.if %10 {
      %17 = vector.broadcast %6 : vector<8x1xi32> to vector<8x128xi32>
      %18 = vector.broadcast %7 : vector<1x128xi32> to vector<8x128xi32>
      %19 = arith.cmpi eq, %17, %18 : vector<8x128xi32>
      %20 = arith.extui %19 : vector<8x128xi1> to vector<8x128xi32>
      %21 = arith.sitofp %20 : vector<8x128xi32> to vector<8x128xf32>
      %c0_14 = arith.constant 0 : index
      %c0_15 = arith.constant 0 : index
      %22 = vector.load %arg8[%c0_14, %c0_15] : memref<8x1xf32, #tpu.memory_space<vmem>>, vector<8x1xf32>
      %cst_16 = arith.constant dense<0xFF800000> : vector<8xf32>
      %23 = vector.multi_reduction <maximumf>, %5, %cst_16 [1] : vector<8x128xf32> to vector<8xf32>
      %24 = vector.shape_cast %23 : vector<8xf32> to vector<8x1xf32>
      %25 = arith.maximumf %22, %24 : vector<8x1xf32>
      %26 = arith.subf %22, %25 : vector<8x1xf32>
      %27 = math.exp %26 : vector<8x1xf32>
      %28 = vector.broadcast %25 : vector<8x1xf32> to vector<8x128xf32>
      %29 = arith.subf %5, %28 : vector<8x128xf32>
      %30 = math.exp %29 : vector<8x128xf32>
      %c0_17 = arith.constant 0 : index
      %c0_18 = arith.constant 0 : index
      %31 = vector.load %arg9[%c0_17, %c0_18] : memref<8x1xf32, #tpu.memory_space<vmem>>, vector<8x1xf32>
      %32 = arith.mulf %27, %31 : vector<8x1xf32>
      %cst_19 = arith.constant dense<0.000000e+00> : vector<8xf32>
      %33 = vector.multi_reduction <add>, %30, %cst_19 [1] : vector<8x128xf32> to vector<8xf32>
      %34 = vector.shape_cast %33 : vector<8xf32> to vector<8x1xf32>
      %35 = arith.addf %32, %34 : vector<8x1xf32>
      %c0_20 = arith.constant 0 : index
      %c0_21 = arith.constant 0 : index
      %36 = vector.load %arg9[%c0_20, %c0_21] : memref<8x1xf32, #tpu.memory_space<vmem>>, vector<8x1xf32>
      tpu.vector_store %arg9[%c0_20, %c0_21], %35 {strides = array<i32>} : memref<8x1xf32, #tpu.memory_space<vmem>>, vector<8x1xf32>,
      %c0_22 = arith.constant 0 : index
      %c0_23 = arith.constant 0 : index
      %37 = vector.load %arg10[%c0_22, %c0_23] : memref<8x1xf32, #tpu.memory_space<vmem>>, vector<8x1xf32>
      %38 = arith.mulf %21, %5 : vector<8x128xf32>
      %cst_24 = arith.constant dense<0.000000e+00> : vector<8xf32>
      %39 = vector.multi_reduction <add>, %38, %cst_24 [1] : vector<8x128xf32> to vector<8xf32>
      %40 = vector.shape_cast %39 : vector<8xf32> to vector<8x1xf32>
      %41 = arith.addf %37, %40 : vector<8x1xf32>
      %c0_25 = arith.constant 0 : index
      %c0_26 = arith.constant 0 : index
      %42 = vector.load %arg10[%c0_25, %c0_26] : memref<8x1xf32, #tpu.memory_space<vmem>>, vector<8x1xf32>
      tpu.vector_store %arg10[%c0_25, %c0_26], %41 {strides = array<i32>} : memref<8x1xf32, #tpu.memory_space<vmem>>, vector<8x1xf32>,
      %c0_27 = arith.constant 0 : index
      %c0_28 = arith.constant 0 : index
      %43 = vector.load %arg8[%c0_27, %c0_28] : memref<8x1xf32, #tpu.memory_space<vmem>>, vector<8x1xf32>
      tpu.vector_store %arg8[%c0_27, %c0_28], %25 {strides = array<i32>} : memref<8x1xf32, #tpu.memory_space<vmem>>, vector<8x1xf32>,
    } else {
    }
    %c0_i32_10 = arith.constant 0 : i32
    %11 = arith.cmpi eq, %arg1, %c0_i32_10 : i32
    %12 = arith.extui %11 : i1 to i32
    %c0_i32_11 = arith.constant 0 : i32
    %13 = arith.cmpi ne, %12, %c0_i32_11 : i32
    scf.if %13 {
      %c128_i32 = arith.constant 128 : i32
      %17 = arith.muli %arg1, %c128_i32 : i32
      %18 = tpu.iota {dimensions = array<i32: 1>} : vector<1x128xi32>
      %19 = vector.broadcast %17 : i32 to vector<1x128xi32>
      %20 = arith.addi %19, %18 : vector<1x128xi32>
      %c8_i32 = arith.constant 8 : i32
      %21 = vector.broadcast %c8_i32 : i32 to vector<1x128xi32>
      %22 = arith.cmpi slt, %20, %21 : vector<1x128xi32>
      %23 = vector.broadcast %6 : vector<8x1xi32> to vector<8x128xi32>
      %24 = vector.broadcast %7 : vector<1x128xi32> to vector<8x128xi32>
      %25 = arith.cmpi eq, %23, %24 : vector<8x128xi32>
      %26 = vector.broadcast %22 : vector<1x128xi1> to vector<8x128xi1>
      %27 = arith.andi %25, %26 : vector<8x128xi1>
      %28 = arith.extui %27 : vector<8x128xi1> to vector<8x128xi32>
      %29 = arith.sitofp %28 : vector<8x128xi32> to vector<8x128xf32>
      %cst_14 = arith.constant -1.000000e+30 : f32
      %30 = vector.shape_cast %22 : vector<1x128xi1> to vector<1x128xi1>
      %31 = vector.broadcast %30 : vector<1x128xi1> to vector<8x128xi1>
      %32 = vector.broadcast %cst_14 : f32 to vector<8x128xf32>
      %33 = arith.select %31, %5, %32 : vector<8x128xi1>, vector<8x128xf32>
      %c0_15 = arith.constant 0 : index
      %c0_16 = arith.constant 0 : index
      %34 = vector.load %arg8[%c0_15, %c0_16] : memref<8x1xf32, #tpu.memory_space<vmem>>, vector<8x1xf32>
      %cst_17 = arith.constant dense<0xFF800000> : vector<8xf32>
      %35 = vector.multi_reduction <maximumf>, %33, %cst_17 [1] : vector<8x128xf32> to vector<8xf32>
      %36 = vector.shape_cast %35 : vector<8xf32> to vector<8x1xf32>
      %37 = arith.maximumf %34, %36 : vector<8x1xf32>
      %38 = arith.subf %34, %37 : vector<8x1xf32>
      %39 = math.exp %38 : vector<8x1xf32>
      %40 = vector.broadcast %37 : vector<8x1xf32> to vector<8x128xf32>
      %41 = arith.subf %33, %40 : vector<8x128xf32>
      %42 = math.exp %41 : vector<8x128xf32>
      %c0_18 = arith.constant 0 : index
      %c0_19 = arith.constant 0 : index
      %43 = vector.load %arg9[%c0_18, %c0_19] : memref<8x1xf32, #tpu.memory_space<vmem>>, vector<8x1xf32>
      %44 = arith.mulf %39, %43 : vector<8x1xf32>
      %cst_20 = arith.constant dense<0.000000e+00> : vector<8xf32>
      %45 = vector.multi_reduction <add>, %42, %cst_20 [1] : vector<8x128xf32> to vector<8xf32>
      %46 = vector.shape_cast %45 : vector<8xf32> to vector<8x1xf32>
      %47 = arith.addf %44, %46 : vector<8x1xf32>
      %c0_21 = arith.constant 0 : index
      %c0_22 = arith.constant 0 : index
      %48 = vector.load %arg9[%c0_21, %c0_22] : memref<8x1xf32, #tpu.memory_space<vmem>>, vector<8x1xf32>
      tpu.vector_store %arg9[%c0_21, %c0_22], %47 {strides = array<i32>} : memref<8x1xf32, #tpu.memory_space<vmem>>, vector<8x1xf32>,
      %c0_23 = arith.constant 0 : index
      %c0_24 = arith.constant 0 : index
      %49 = vector.load %arg10[%c0_23, %c0_24] : memref<8x1xf32, #tpu.memory_space<vmem>>, vector<8x1xf32>
      %50 = arith.mulf %29, %5 : vector<8x128xf32>
      %cst_25 = arith.constant dense<0.000000e+00> : vector<8xf32>
      %51 = vector.multi_reduction <add>, %50, %cst_25 [1] : vector<8x128xf32> to vector<8xf32>
      %52 = vector.shape_cast %51 : vector<8xf32> to vector<8x1xf32>
      %53 = arith.addf %49, %52 : vector<8x1xf32>
      %c0_26 = arith.constant 0 : index
      %c0_27 = arith.constant 0 : index
      %54 = vector.load %arg10[%c0_26, %c0_27] : memref<8x1xf32, #tpu.memory_space<vmem>>, vector<8x1xf32>
      tpu.vector_store %arg10[%c0_26, %c0_27], %53 {strides = array<i32>} : memref<8x1xf32, #tpu.memory_space<vmem>>, vector<8x1xf32>,
      %c0_28 = arith.constant 0 : index
      %c0_29 = arith.constant 0 : index
      %55 = vector.load %arg8[%c0_28, %c0_29] : memref<8x1xf32, #tpu.memory_space<vmem>>, vector<8x1xf32>
      tpu.vector_store %arg8[%c0_28, %c0_29], %37 {strides = array<i32>} : memref<8x1xf32, #tpu.memory_space<vmem>>, vector<8x1xf32>,
    } else {
    }
    %c0_i32_12 = arith.constant 0 : i32
    %14 = arith.cmpi eq, %arg1, %c0_i32_12 : i32
    %15 = arith.extui %14 : i1 to i32
    %c0_i32_13 = arith.constant 0 : i32
    %16 = arith.cmpi ne, %15, %c0_i32_13 : i32
    scf.if %16 {
      %c0_14 = arith.constant 0 : index
      %c0_15 = arith.constant 0 : index
      %17 = vector.load %arg8[%c0_14, %c0_15] : memref<8x1xf32, #tpu.memory_space<vmem>>, vector<8x1xf32>
      %c0_16 = arith.constant 0 : index
      %c0_17 = arith.constant 0 : index
      %18 = vector.load %arg9[%c0_16, %c0_17] : memref<8x1xf32, #tpu.memory_space<vmem>>, vector<8x1xf32>
      %19 = math.log %18 : vector<8x1xf32>
      %20 = arith.addf %17, %19 : vector<8x1xf32>
      %c0_18 = arith.constant 0 : index
      %c0_19 = arith.constant 0 : index
      %21 = vector.load %arg10[%c0_18, %c0_19] : memref<8x1xf32, #tpu.memory_space<vmem>>, vector<8x1xf32>
      %c0_20 = arith.constant 0 : index
      %c0_21 = arith.constant 0 : index
      %22 = vector.load %arg6[%c0_20, %c0_21] : memref<8x1xf32, #tpu.memory_space<vmem>>, vector<8x1xf32>
      %23 = arith.mulf %21, %22 : vector<8x1xf32>
      %24 = arith.subf %20, %23 : vector<8x1xf32>
      %cst_22 = arith.constant 1.250000e-01 : f32
      %25 = vector.broadcast %cst_22 : f32 to vector<8x1xf32>
      %26 = arith.mulf %24, %25 : vector<8x1xf32>
      %c0_23 = arith.constant 0 : index
      %c0_24 = arith.constant 0 : index
      %27 = vector.load %arg7[%c0_23, %c0_24] : memref<8x1xf32, #tpu.memory_space<vmem>>, vector<8x1xf32>
      tpu.vector_store %arg7[%c0_23, %c0_24], %26 {strides = array<i32>} : memref<8x1xf32, #tpu.memory_space<vmem>>, vector<8x1xf32>,
    } else {
    }
    return
  }
  func.func @transform_0(%arg0: i32, %arg1: i32) -> (i32, i32) {
    %c0_i32 = arith.constant 0 : i32
    %c0_i32_0 = arith.constant 0 : i32
    return %arg0, %c0_i32 : i32, i32
  }
  func.func @transform_1(%arg0: i32, %arg1: i32) -> (i32, i32) {
    %c0_i32 = arith.constant 0 : i32
    %c0_i32_0 = arith.constant 0 : i32
    return %arg1, %c0_i32 : i32, i32
  }
  func.func @transform_2(%arg0: i32, %arg1: i32) -> (i32, i32) {
    %c0_i32 = arith.constant 0 : i32
    %c0_i32_0 = arith.constant 0 : i32
    return %arg0, %c0_i32 : i32, i32
  }
  func.func @transform_3(%arg0: i32, %arg1: i32) -> (i32, i32) {
    %c0_i32 = arith.constant 0 : i32
    %c0_i32_0 = arith.constant 0 : i32
    return %c0_i32, %arg1 : i32, i32
  }
  func.func @transform_4(%arg0: i32, %arg1: i32) -> (i32, i32) {
    %c0_i32 = arith.constant 0 : i32
    %c0_i32_0 = arith.constant 0 : i32
    return %arg0, %c0_i32 : i32, i32
  }
  func.func @transform_5(%arg0: i32, %arg1: i32) -> (i32, i32) {
    %c0_i32 = arith.constant 0 : i32
    %c0_i32_0 = arith.constant 0 : i32
    return %arg0, %c0_i32 : i32, i32
  }
}

</mosaic_0001>

<llo_original>
// kernel: tpu_custom_call.1
$region0: #{tpu_custom_call.1}
  #allocation0 [shape = 'u32[]', space=smem, size = 0x4, offset = 0x4, fixed_abs, tag = 'smem constant byte address 0x4 - core index']
  #allocation1 [shape = 'u32[144,128]{1,0:T(1,128)}', space=vmem, size = 0x12000, scoped, tag = 'internal scratch']
  #allocation2 [shape = 'f32[8,1]{1,0:T(8,128)}', space=vmem, size = 0x1000, scoped, tag = 'scratch operand']
  #allocation3 [shape = 'f32[8,1]{1,0:T(8,128)}', space=vmem, size = 0x1000, scoped, tag = 'scratch operand']
  #allocation4 [shape = 'f32[8,1]{1,0:T(8,128)}', space=vmem, size = 0x1000, scoped, tag = 'scratch operand']
  %s0 = inlined_call_operand.vmem [shape: f32[8,32], index: 0, kind: input, shape index: {}]
  %s1 = inlined_call_operand.vmem [shape: f32[128,32], index: 1, kind: input, shape index: {}]
  %s2 = inlined_call_operand.vmem [shape: s32[8,1], index: 2, kind: input, shape index: {}]
  %s3 = inlined_call_operand.vmem [shape: s32[1,128], index: 3, kind: input, shape index: {}]
  %s4 = inlined_call_operand.vmem [shape: f32[8,1], index: 4, kind: input, shape index: {}]
  %s5 = inlined_call_operand.vmem [shape: f32[8,1], index: 5, kind: output, shape index: {}]
  %s6 = sld [smem:[#allocation0]]
  $region42: #{tpu_custom_call.1} parent=0
    _
  %s8 = ssub.s32 1, %s6
  %s9 = scalar_select 0, %s8, %s6
  // Predicated region
  $region2: #{tpu_custom_call.1} parent=0 // pred_check
    _
  $region3: #{tpu_custom_call.1} parent=0 // pred_check_branch
    %11 = sbr.rel (0) target = $region5
  $region4: #{tpu_custom_call.1} parent=0 // pred_region
    _
  $region5: #{tpu_custom_call.1} parent=0 // pred_fallthru
    _
  // Predicated region
  $region6: #{tpu_custom_call.1} parent=0 // pred_check
    _
  $region7: #{tpu_custom_call.1} parent=0 // pred_check_branch
    %13 = sbr.rel (0) target = $region9
  $region8: #{tpu_custom_call.1} parent=0 // pred_region
    _
  $region9: #{tpu_custom_call.1} parent=0 // pred_fallthru
    _
  // Predicated region
  $region10: #{tpu_custom_call.1} parent=0 // pred_check
    _
  $region11: #{tpu_custom_call.1} parent=0 // pred_check_branch
    %15 = sbr.rel (0) target = $region13
  $region12: #{tpu_custom_call.1} parent=0 // pred_region
    _
  $region13: #{tpu_custom_call.1} parent=0 // pred_fallthru
    _
  // Predicated region
  $region14: #{tpu_custom_call.1} parent=0 // pred_check
    _
  $region15: #{tpu_custom_call.1} parent=0 // pred_check_branch
    %17 = sbr.rel (0) target = $region17
  $region16: #{tpu_custom_call.1} parent=0 // pred_region
    _
  $region17: #{tpu_custom_call.1} parent=0 // pred_fallthru
    _
  // Predicated region
  $region18: #{tpu_custom_call.1} parent=0 // pred_check
    _
  $region19: #{tpu_custom_call.1} parent=0 // pred_check_branch
    %19 = sbr.rel (0) target = $region21
  $region20: #{tpu_custom_call.1} parent=0 // pred_region
    _
  $region21: #{tpu_custom_call.1} parent=0 // pred_fallthru
    _
  %p20 = scmp.eq.s32.totalorder 0, 0
  // Predicated region
  $region22: #{tpu_custom_call.1} parent=0 // pred_check
    %p21 = pneg %p20
  $region23: #{tpu_custom_call.1} parent=0 // pred_check_branch
    %23 = sbr.rel (%p21) target = $region25
  $region24: #{tpu_custom_call.1} parent=0 // pred_region
    %vm24 = vcmask 7168
    %25 = vst.msk [vmem:[#allocation2] sm:$0xff] %vm24, -inf
    %26 = vst.msk [vmem:[#allocation3] sm:$0xff] %vm24, 0.0
    %27 = vst.msk [vmem:[#allocation4] sm:$0xff] %vm24, 0.0
  $region25: #{tpu_custom_call.1} parent=0 // pred_fallthru
    _
  %v28 = vld [vmem:[%s0] sm:$0xff]
  %v29 = vld [vmem:[%s1] sm:$0xff]
  %v30 = vld [vmem:[%s1 + $0x8] sm:$0xff]
  %v31 = vld [vmem:[%s1 + $0x10] sm:$0xff]
  %v32 = vld [vmem:[%s1 + $0x18] sm:$0xff]
  %v33 = vld [vmem:[%s1 + $0x20] sm:$0xff]
  %v34 = vld [vmem:[%s1 + $0x28] sm:$0xff]
  %v35 = vld [vmem:[%s1 + $0x30] sm:$0xff]
  %v36 = vld [vmem:[%s1 + $0x38] sm:$0xff]
  %v37 = vld [vmem:[%s1 + $0x40] sm:$0xff]
  %v38 = vld [vmem:[%s1 + $0x48] sm:$0xff]
  %v39 = vld [vmem:[%s1 + $0x50] sm:$0xff]
  %v40 = vld [vmem:[%s1 + $0x58] sm:$0xff]
  %v41 = vld [vmem:[%s1 + $0x60] sm:$0xff]
  %v42 = vld [vmem:[%s1 + $0x68] sm:$0xff]
  %v43 = vld [vmem:[%s1 + $0x70] sm:$0xff]
  %v44 = vld [vmem:[%s1 + $0x78] sm:$0xff]
  %vm45 = vcmask 261120
  %v47 = vsel %vm45, %v28, 0
  %v50 = vsel %vm45, %v29, 0
  %v53 = vsel %vm45, %v30, 0
  %v56 = vsel %vm45, %v31, 0
  %v59 = vsel %vm45, %v32, 0
  %v62 = vsel %vm45, %v33, 0
  %v65 = vsel %vm45, %v34, 0
  %v68 = vsel %vm45, %v35, 0
  %v71 = vsel %vm45, %v36, 0
  %v74 = vsel %vm45, %v37, 0
  %v77 = vsel %vm45, %v38, 0
  %v80 = vsel %vm45, %v39, 0
  %v83 = vsel %vm45, %v40, 0
  %v86 = vsel %vm45, %v41, 0
  %v89 = vsel %vm45, %v42, 0
  %v92 = vsel %vm45, %v43, 0
  %v95 = vsel %vm45, %v44, 0
  %97 = vmatprep.subr.mxu0 0.0
  %98 = vmatpush1.xpose.msra.mxu0 %v50
  %99 = vmatprep.subr.mxu0 0.0
  %100 = vmatpush1.xpose.msra.mxu0 %v53
  %101 = vmatprep.subr.mxu0 0.0
  %102 = vmatpush1.xpose.msra.mxu0 %v56
  %103 = vmatprep.subr.mxu0 0.0
  %104 = vmatpush1.xpose.msra.mxu0 %v59
  %105 = vmatprep.subr.mxu0 0.0
  %106 = vmatpush1.xpose.msra.mxu0 %v62
  %107 = vmatprep.subr.mxu0 0.0
  %108 = vmatpush1.xpose.msra.mxu0 %v65
  %109 = vmatprep.subr.mxu0 0.0
  %110 = vmatpush1.xpose.msra.mxu0 %v68
  %111 = vmatprep.subr.mxu0 0.0
  %112 = vmatpush1.xpose.msra.mxu0 %v71
  %113 = vmatprep.subr.mxu0 0.0
  %114 = vmatpush1.xpose.msra.mxu0 %v74
  %115 = vmatprep.subr.mxu0 0.0
  %116 = vmatpush1.xpose.msra.mxu0 %v77
  %117 = vmatprep.subr.mxu0 0.0
  %118 = vmatpush1.xpose.msra.mxu0 %v80
  %119 = vmatprep.subr.mxu0 0.0
  %120 = vmatpush1.xpose.msra.mxu0 %v83
  %121 = vmatprep.subr.mxu0 0.0
  %122 = vmatpush1.xpose.msra.mxu0 %v86
  %123 = vmatprep.subr.mxu0 0.0
  %124 = vmatpush1.xpose.msra.mxu0 %v89
  %125 = vmatprep.subr.mxu0 0.0
  %126 = vmatpush1.xpose.msra.mxu0 %v92
  %127 = vmatprep.subr.mxu0 0.0
  %128 = vmatpush1.xpose.msra.mxu0 %v95
  %129 = vmatprep.subr.mxu0 0.0
  %130 = vmatpush1.xpose.msra.mxu0 0.0
  %131 = vmatprep.subr.mxu0 0.0
  %132 = vmatpush1.xpose.msra.mxu0 0.0
  %133 = vmatprep.subr.mxu0 0.0
  %134 = vmatpush1.xpose.msra.mxu0 0.0
  %135 = vmatprep.subr.mxu0 0.0
  %136 = vmatpush1.xpose.msra.mxu0 0.0
  %137 = vmatprep.subr.mxu0 0.0
  %138 = vmatpush1.xpose.msra.mxu0 0.0
  %139 = vmatprep.subr.mxu0 0.0
  %140 = vmatpush1.xpose.msra.mxu0 0.0
  %141 = vmatprep.subr.mxu0 0.0
  %142 = vmatpush1.xpose.msra.mxu0 0.0
  %143 = vmatprep.subr.mxu0 0.0
  %144 = vmatpush1.xpose.msra.mxu0 0.0
  %145 = vmatprep.subr.mxu0 0.0
  %146 = vmatpush1.xpose.msra.mxu0 0.0
  %147 = vmatprep.subr.mxu0 0.0
  %148 = vmatpush1.xpose.msra.mxu0 0.0
  %149 = vmatprep.subr.mxu0 0.0
  %150 = vmatpush1.xpose.msra.mxu0 0.0
  %151 = vmatprep.subr.mxu0 0.0
  %152 = vmatpush1.xpose.msra.mxu0 0.0
  %153 = vmatprep.subr.mxu0 0.0
  %154 = vmatpush1.xpose.msra.mxu0 0.0
  %155 = vmatprep.subr.mxu0 0.0
  %156 = vmatpush1.xpose.msra.mxu0 0.0
  %157 = vmatprep.subr.mxu0 0.0
  %158 = vmatpush1.xpose.msra.mxu0 0.0
  %159 = vmatprep.subr.mxu0 0.0
  %160 = vmatpush1.xpose.msra.mxu0 0.0
  %161 = vmatprep.mubr.f32.mxu0 0.0
  %162 = vmatmul.mubr.f32.gmra.mrb[0].mxu0 %v47
  %v163 = vpop.f32.mrb[0].mxu0
  %v164 = vadd.f32 0.0, %v163
  %v165 = vpop.f32.mrb[0].mxu0
  %166 = vdwg.mxu0
  %v167 = vld [vmem:[%s2] sm:$0xff]
  %v168 = vld [vmem:[%s3] sm:$0x1]
  %p169 = scmp.lt.s32.totalorder 0, 0
  // Predicated region
  $region26: #{tpu_custom_call.1} parent=0 // pred_check
    %p170 = pneg %p169
  $region27: #{tpu_custom_call.1} parent=0 // pred_check_branch
    %172 = sbr.rel (%p170) target = $region29
  $region28: #{tpu_custom_call.1} parent=0 // pred_region
    %173 = vset.pattern.permute.xlu0 0
    %174 = vperm.xlu0 %173, %v167
    %v175 = vpop.permute.xlu0 %174
    %v176 = vlaneseq
    %v177 = vshrl.u32 %v176, 7
    %v178 = vsub.s32 0, %v177
    %v179 = vrot.slane %v168, %v178
    %vm180 = vcmp.eq.s32.totalorder %v175, %v179
    %v181 = vsel %vm180, 1, 0
    %v182 = vcvt.s32.f32 %v181
    %v183 = vld [vmem:[#allocation2] sm:$0xff]
    %184 = vmax.xlane.f32.xlu0 %v164
    %v185 = vpop.xlane.xlu0 %184
    %v186 = vmax.f32 %v183, %v185
    %v187 = vsub.f32 %v183, %v186
    %v188 = vmul.f32 %v187, 1.442695
    %v189 = vpow.pop %v188
    %191 = vset.pattern.permute.xlu0 0
    %192 = vperm.xlu0 %191, %v186
    %v193 = vpop.permute.xlu0 %192
    %v195 = vsub.f32 %v164, %v193
    %v196 = vmul.f32 %v195, 1.442695
    %v197 = vpow.pop %v196
    %v198 = vld [vmem:[#allocation3] sm:$0xff]
    %v199 = vmul.f32 %v189, %v198
    %200 = vadd.xlane.f32.xlu0 %v197
    %v201 = vpop.xlane.xlu0 %200
    %v202 = vadd.f32 %v199, %v201
    %vm203 = vcmask 7168
    %204 = vst.msk [vmem:[#allocation3] sm:$0xff] %vm203, %v202
    %v205 = vld [vmem:[#allocation4] sm:$0xff]
    %v206 = vmul.f32 %v182, %v164
    %207 = vadd.xlane.f32.xlu0 %v206
    %v208 = vpop.xlane.xlu0 %207
    %v209 = vadd.f32 %v205, %v208
    %210 = vst.msk [vmem:[#allocation4] sm:$0xff] %vm203, %v209
    %211 = vst.msk [vmem:[#allocation2] sm:$0xff] %vm203, %v186
  $region29: #{tpu_custom_call.1} parent=0 // pred_fallthru
    _
  // Predicated region
  $region30: #{tpu_custom_call.1} parent=0 // pred_check
    %p212 = pneg %p20
  $region31: #{tpu_custom_call.1} parent=0 // pred_check_branch
    %214 = sbr.rel (%p212) target = $region33
  $region32: #{tpu_custom_call.1} parent=0 // pred_region
    %s215 = smul.u32 0, 128
    %v216 = vlaneseq
    %v217 = vand.u32 %v216, 127
    %v218 = vstv %s215
    %v219 = vadd.s32 %v218, %v217
    %vm220 = vcmp.lt.s32.totalorder %v219, 8
    %221 = vset.pattern.permute.xlu0 0
    %222 = vperm.xlu0 %221, %v167
    %v223 = vpop.permute.xlu0 %222
    %v224 = vlaneseq
    %v225 = vshrl.u32 %v224, 7
    %v226 = vsub.s32 0, %v225
    %v227 = vrot.slane %v168, %v226
    %vm228 = vcmp.eq.s32.totalorder %v223, %v227
    %v229 = vsel %vm220, 1, 0
    %vm230 = vcmp.eq.s32.totalorder %v229, 1
    %vm231 = vmand %vm228, %vm230
    %v232 = vsel %vm231, 1, 0
    %v233 = vcvt.s32.f32 %v232
    %v234 = vsel %vm230, %v164, -1e+30
    %v235 = vld [vmem:[#allocation2] sm:$0xff]
    %236 = vmax.xlane.f32.xlu0 %v234
    %v237 = vpop.xlane.xlu0 %236
    %v238 = vmax.f32 %v235, %v237
    %v239 = vsub.f32 %v235, %v238
    %v240 = vmul.f32 %v239, 1.442695
    %v241 = vpow.pop %v240
    %243 = vset.pattern.permute.xlu0 0
    %244 = vperm.xlu0 %243, %v238
    %v245 = vpop.permute.xlu0 %244
    %v247 = vsub.f32 %v234, %v245
    %v248 = vmul.f32 %v247, 1.442695
    %v249 = vpow.pop %v248
    %v250 = vld [vmem:[#allocation3] sm:$0xff]
    %v251 = vmul.f32 %v241, %v250
    %252 = vadd.xlane.f32.xlu0 %v249
    %v253 = vpop.xlane.xlu0 %252
    %v254 = vadd.f32 %v251, %v253
    %vm255 = vcmask 7168
    %256 = vst.msk [vmem:[#allocation3] sm:$0xff] %vm255, %v254
    %v257 = vld [vmem:[#allocation4] sm:$0xff]
    %v258 = vmul.f32 %v233, %v164
    %259 = vadd.xlane.f32.xlu0 %v258
    %v260 = vpop.xlane.xlu0 %259
    %v261 = vadd.f32 %v257, %v260
    %262 = vst.msk [vmem:[#allocation4] sm:$0xff] %vm255, %v261
    %263 = vst.msk [vmem:[#allocation2] sm:$0xff] %vm255, %v238
    %v264 = vld [vmem:[#allocation2] sm:$0xff]
    %v265 = vld [vmem:[#allocation3] sm:$0xff]
    %v266 = vlog2.pop %v265
    %v267 = vmul.f32 %v266, 0.6931472
    %v268 = vadd.f32 %v264, %v267
    %v269 = vld [vmem:[#allocation4] sm:$0xff]
    %v270 = vld [vmem:[%s4] sm:$0xff]
    %v271 = vmul.f32 %v269, %v270
    %v272 = vsub.f32 %v268, %v271
    %v273 = vmul.f32 %v272, 0.125
    %274 = vst.msk [vmem:[%s5] sm:$0xff] %vm255, %v273
  $region33: #{tpu_custom_call.1} parent=0 // pred_fallthru
    _
  // Predicated region
  $region34: #{tpu_custom_call.1} parent=0 // pred_check
    _
  $region35: #{tpu_custom_call.1} parent=0 // pred_check_branch
    %276 = sbr.rel (0) target = $region37
  $region36: #{tpu_custom_call.1} parent=0 // pred_region
    _
  $region37: #{tpu_custom_call.1} parent=0 // pred_fallthru
    _
  // Predicated region
  $region38: #{tpu_custom_call.1} parent=0 // pred_check
    _
  $region39: #{tpu_custom_call.1} parent=0 // pred_check_branch
    %278 = sbr.rel (0) target = $region41
  $region40: #{tpu_custom_call.1} parent=0 // pred_region
    _
  $region41: #{tpu_custom_call.1} parent=0 // pred_fallthru
    _

</llo_original>
